<compile_context>
chip_gen: v5e
topology: v5e:2x2
jax: 0.10.0
libtpu: 0.0.40
codegen_flags: <defaults>
</compile_context>

<pallas_src>
import jax
import jax.numpy as jnp
from jax.experimental import pallas as pl
from jax.experimental.pallas import tpu as pltpu

LANE = 128  # TPU lane width: output feature dim is padded to a multiple of this


def _round_up(x, m):
    return (x + m - 1) // m * m


def _make_mlp_kernel(n_layers):
    """Kernel computing tanh(...tanh(x@W1+b1)...)@Wn+bn for one batch tile."""

    def kernel(x_ref, *refs):
        *wb_refs, o_ref = refs
        cd = wb_refs[0].dtype           # MXU compute dtype (bf16 by default)
        h = x_ref[...]
        for li in range(n_layers):
            w_ref = wb_refs[2 * li]
            b_ref = wb_refs[2 * li + 1]
            # MXU matmul in compute dtype, f32 accumulate; bias add on the VPU.
            h = jnp.dot(h.astype(cd), w_ref[...],
                        preferred_element_type=jnp.float32) + b_ref[...]
            if li < n_layers - 1:       # hidden layers get Tanh, output does not
                h = jnp.tanh(h)
        o_ref[...] = h.astype(o_ref.dtype)

    return kernel


def estimator_network_forward(states, params, *, batch_tile=128,
                              compute_dtype=jnp.bfloat16):
    """Fused EstimatorNetwork forward pass.

    states : (B, ...) float32 -- flattened to (B, D), matching nn.Flatten.
    params : dict with w{i} of shape (in, out) and b{i} of shape (1, out)
             (PyTorch nn.Linear weight transposed so the kernel does x @ W + b).
    """
    n_layers = len(params) // 2
    weights = [params[f"w{i + 1}"] for i in range(n_layers)]
    biases = [params[f"b{i + 1}"] for i in range(n_layers)]

    B = states.shape[0]
    x = states.reshape(B, -1).astype(jnp.float32)     # nn.Flatten
    D = x.shape[1]
    A = weights[-1].shape[1]

    # MXU operands in compute_dtype (bf16 on v6e/v7x); biases stay f32.
    weights = [w.astype(compute_dtype) for w in weights]
    biases = [b.astype(jnp.float32) for b in biases]

    # Lane-dense output: zero-pad the action dim to a multiple of 128 so the
    # output stores are full-lane; the padding columns are exactly zero and are
    # sliced off below.
    A_pad = _round_up(A, LANE)
    if A_pad != A:
        weights[-1] = jnp.zeros((weights[-1].shape[0], A_pad), compute_dtype
                                ).at[:, :A].set(weights[-1])
        biases[-1] = jnp.zeros((1, A_pad), jnp.float32).at[:, :A].set(biases[-1])

    # Batch grid: TB rows per grid step. Small batches run as one full block
    # (exempt from the (8,128) rule); large batches are padded to a multiple of
    # the 128-row tile and pipelined / megacore-split.
    if B <= batch_tile:
        TB, B_pad = B, B
    else:
        TB = batch_tile
        B_pad = _round_up(B, TB)
        if B_pad != B:
            x = jnp.pad(x, ((0, B_pad - B), (0, 0)))
    grid = (B_pad // TB,)

    wb = []
    for w, b in zip(weights, biases):
        wb += [w, b]

    # Weights/biases: constant index map -> VMEM-resident across all tiles.
    const = lambda arr: pl.BlockSpec(arr.shape, lambda i: (0,) * arr.ndim)

    out = pl.pallas_call(
        _make_mlp_kernel(n_layers),
        out_shape=jax.ShapeDtypeStruct((B_pad, A_pad), jnp.float32),
        grid=grid,
        in_specs=[pl.BlockSpec((TB, D), lambda i: (i, 0))] + [const(a) for a in wb],
        out_specs=pl.BlockSpec((TB, A_pad), lambda i: (i, 0)),
        compiler_params=pltpu.CompilerParams(
            dimension_semantics=("parallel",),   # both v7x TCs split the batch
            vmem_limit_bytes=32 << 20,           # fits v7x's 64 MiB/TC budget
        ),
    )(x, *wb)

    return out[:B, :A]


def init_params(key, state_dim, mlp_layers, action_num):
    """Parameter init mirroring the PyTorch module's layer shapes.

    PyTorch nn.Linear stores weight as (out, in); we store (in, out) so the
    kernel computes x @ W + b (== x @ weight.T + bias).
    """
    layer_dims = [state_dim] + list(mlp_layers) + [action_num]
    params = {}
    for i in range(len(layer_dims) - 1):
        fan_in, fan_out = layer_dims[i], layer_dims[i + 1]
        key, kw, kb = jax.random.split(key, 3)
        bound = 1.0 / jnp.sqrt(fan_in)
        params[f"w{i + 1}"] = jax.random.uniform(
            kw, (fan_in, fan_out), jnp.float32, -bound, bound)
        params[f"b{i + 1}"] = jax.random.uniform(
            kb, (1, fan_out), jnp.float32, -bound, bound)
    return params


def reference_forward(states, params):
    n_layers = len(params) // 2
    h = states.reshape(states.shape[0], -1)
    for i in range(n_layers):
        h = h @ params[f"w{i + 1}"] + params[f"b{i + 1}"]
        if i < n_layers - 1:
            h = jnp.tanh(h)
    return h


if __name__ == "__main__":
    # Shapes consistent with the module:
    #   state_shape = [32] -> state_dim = 32, mlp_layers = [64, 64], action_num = 4
    batch, state_dim = 2, 32
    mlp_layers = [64, 64]
    action_num = 4

    key = jax.random.PRNGKey(0)
    key, k_states = jax.random.split(key)
    states = jax.random.normal(k_states, (batch, state_dim), jnp.float32)
    params = init_params(key, state_dim, mlp_layers, action_num)

    ref = reference_forward(states, params)

    # f32 MXU path: numerically faithful to the PyTorch module.
    out_f32 = jax.block_until_ready(
        estimator_network_forward(states, params, compute_dtype=jnp.float32))
    assert out_f32.shape == (batch, action_num)
    assert jnp.allclose(out_f32, ref, atol=1e-5, rtol=1e-5)

    # bf16 MXU path (default / perf path on v6e-v7x): f32 accumulation keeps
    # the error well inside this network's tolerance.
    out_bf16 = jax.block_until_ready(estimator_network_forward(states, params))
    assert out_bf16.shape == (batch, action_num)
    assert jnp.allclose(out_bf16, ref, atol=5e-2, rtol=5e-2)

    # Larger batch exercises the batch grid (tiling, padding, parallel axis).
    key, k_big = jax.random.split(key)
    big_states = jax.random.normal(k_big, (300, state_dim), jnp.float32)
    out_big = jax.block_until_ready(estimator_network_forward(big_states, params))
    ref_big = reference_forward(big_states, params)
    assert out_big.shape == (300, action_num)
    assert jnp.allclose(out_big, ref_big, atol=5e-2, rtol=5e-2)

    print("KERNEL_OK")
</pallas_src>

<mosaic_0001>
module attributes {stable_mosaic.version = 11 : i64} {
  func.func @kernel(%arg0: i32, %arg1: memref<2x32xf32, #tpu.memory_space<vmem>>, %arg2: memref<32x64xf32, #tpu.memory_space<vmem>>, %arg3: memref<1x64xf32, #tpu.memory_space<vmem>>, %arg4: memref<64x64xf32, #tpu.memory_space<vmem>>, %arg5: memref<1x64xf32, #tpu.memory_space<vmem>>, %arg6: memref<64x128xf32, #tpu.memory_space<vmem>>, %arg7: memref<1x128xf32, #tpu.memory_space<vmem>>, %arg8: memref<2x128xf32, #tpu.memory_space<vmem>>) attributes {dimension_semantics = [#tpu.dimension_semantics<parallel>], iteration_bounds = array<i64: 1>, scalar_prefetch = 0 : i64, scratch_operands = 0 : i64, tpu.core_type = #tpu.core_type<tc>, window_params = [{transform_indices = @transform_0, window_bounds = array<i64: 2, 32>}, {pipeline_mode = #tpu.pipeline_mode<synchronous>, transform_indices = @transform_1, window_bounds = array<i64: 32, 64>}, {pipeline_mode = #tpu.pipeline_mode<synchronous>, transform_indices = @transform_2, window_bounds = array<i64: 1, 64>}, {pipeline_mode = #tpu.pipeline_mode<synchronous>, transform_indices = @transform_3, window_bounds = array<i64: 64, 64>}, {pipeline_mode = #tpu.pipeline_mode<synchronous>, transform_indices = @transform_4, window_bounds = array<i64: 1, 64>}, {pipeline_mode = #tpu.pipeline_mode<synchronous>, transform_indices = @transform_5, window_bounds = array<i64: 64, 128>}, {pipeline_mode = #tpu.pipeline_mode<synchronous>, transform_indices = @transform_6, window_bounds = array<i64: 1, 128>}, {transform_indices = @transform_7, window_bounds = array<i64: 2, 128>}]} {
    %c0 = arith.constant 0 : index
    %c0_0 = arith.constant 0 : index
    %0 = vector.load %arg1[%c0, %c0_0] : memref<2x32xf32, #tpu.memory_space<vmem>>, vector<2x32xf32>
    %c0_1 = arith.constant 0 : index
    %c0_2 = arith.constant 0 : index
    %1 = vector.load %arg2[%c0_1, %c0_2] : memref<32x64xf32, #tpu.memory_space<vmem>>, vector<32x64xf32>
    %cst = arith.constant dense<0.000000e+00> : vector<2x64xf32>
    %2 = tpu.matmul %0, %1, %cst {dimension_numbers = #tpu.dot_dimension_numbers<[1], [0], [0], [1], [0, 0, 1, 1], [], []>} : vector<2x32xf32>, vector<32x64xf32>, vector<2x64xf32> -> vector<2x64xf32>
    %c0_3 = arith.constant 0 : index
    %c0_4 = arith.constant 0 : index
    %3 = vector.load %arg3[%c0_3, %c0_4] : memref<1x64xf32, #tpu.memory_space<vmem>>, vector<1x64xf32>
    %4 = vector.broadcast %3 : vector<1x64xf32> to vector<2x64xf32>
    %5 = arith.addf %2, %4 : vector<2x64xf32>
    %6 = math.tanh %5 : vector<2x64xf32>
    %c0_5 = arith.constant 0 : index
    %c0_6 = arith.constant 0 : index
    %7 = vector.load %arg4[%c0_5, %c0_6] : memref<64x64xf32, #tpu.memory_space<vmem>>, vector<64x64xf32>
    %cst_7 = arith.constant dense<0.000000e+00> : vector<2x64xf32>
    %8 = tpu.matmul %6, %7, %cst_7 {dimension_numbers = #tpu.dot_dimension_numbers<[1], [0], [0], [1], [0, 0, 1, 1], [], []>} : vector<2x64xf32>, vector<64x64xf32>, vector<2x64xf32> -> vector<2x64xf32>
    %c0_8 = arith.constant 0 : index
    %c0_9 = arith.constant 0 : index
    %9 = vector.load %arg5[%c0_8, %c0_9] : memref<1x64xf32, #tpu.memory_space<vmem>>, vector<1x64xf32>
    %10 = vector.broadcast %9 : vector<1x64xf32> to vector<2x64xf32>
    %11 = arith.addf %8, %10 : vector<2x64xf32>
    %12 = math.tanh %11 : vector<2x64xf32>
    %c0_10 = arith.constant 0 : index
    %c0_11 = arith.constant 0 : index
    %13 = vector.load %arg6[%c0_10, %c0_11] : memref<64x128xf32, #tpu.memory_space<vmem>>, vector<64x128xf32>
    %cst_12 = arith.constant dense<0.000000e+00> : vector<2x128xf32>
    %14 = tpu.matmul %12, %13, %cst_12 {dimension_numbers = #tpu.dot_dimension_numbers<[1], [0], [0], [1], [0, 0, 1, 1], [], []>} : vector<2x64xf32>, vector<64x128xf32>, vector<2x128xf32> -> vector<2x128xf32>
    %c0_13 = arith.constant 0 : index
    %c0_14 = arith.constant 0 : index
    %15 = vector.load %arg7[%c0_13, %c0_14] : memref<1x128xf32, #tpu.memory_space<vmem>>, vector<1x128xf32>
    %16 = vector.broadcast %15 : vector<1x128xf32> to vector<2x128xf32>
    %17 = arith.addf %14, %16 : vector<2x128xf32>
    %c0_15 = arith.constant 0 : index
    %c0_16 = arith.constant 0 : index
    %18 = vector.load %arg8[%c0_15, %c0_16] : memref<2x128xf32, #tpu.memory_space<vmem>>, vector<2x128xf32>
    tpu.vector_store %arg8[%c0_15, %c0_16], %17 {strides = array<i32>} : memref<2x128xf32, #tpu.memory_space<vmem>>, vector<2x128xf32>,
    return
  }
  func.func @transform_0(%arg0: i32) -> (i32, i32) {
    %c0_i32 = arith.constant 0 : i32
    %c0_i32_0 = arith.constant 0 : i32
    return %arg0, %c0_i32 : i32, i32
  }
  func.func @transform_1(%arg0: i32) -> (i32, i32) {
    %c0_i32 = arith.constant 0 : i32
    %c0_i32_0 = arith.constant 0 : i32
    %c0_i32_1 = arith.constant 0 : i32
    return %c0_i32, %c0_i32_0 : i32, i32
  }
  func.func @transform_2(%arg0: i32) -> (i32, i32) {
    %c0_i32 = arith.constant 0 : i32
    %c0_i32_0 = arith.constant 0 : i32
    %c0_i32_1 = arith.constant 0 : i32
    return %c0_i32, %c0_i32_0 : i32, i32
  }
  func.func @transform_3(%arg0: i32) -> (i32, i32) {
    %c0_i32 = arith.constant 0 : i32
    %c0_i32_0 = arith.constant 0 : i32
    %c0_i32_1 = arith.constant 0 : i32
    return %c0_i32, %c0_i32_0 : i32, i32
  }
  func.func @transform_4(%arg0: i32) -> (i32, i32) {
    %c0_i32 = arith.constant 0 : i32
    %c0_i32_0 = arith.constant 0 : i32
    %c0_i32_1 = arith.constant 0 : i32
    return %c0_i32, %c0_i32_0 : i32, i32
  }
  func.func @transform_5(%arg0: i32) -> (i32, i32) {
    %c0_i32 = arith.constant 0 : i32
    %c0_i32_0 = arith.constant 0 : i32
    %c0_i32_1 = arith.constant 0 : i32
    return %c0_i32, %c0_i32_0 : i32, i32
  }
  func.func @transform_6(%arg0: i32) -> (i32, i32) {
    %c0_i32 = arith.constant 0 : i32
    %c0_i32_0 = arith.constant 0 : i32
    %c0_i32_1 = arith.constant 0 : i32
    return %c0_i32, %c0_i32_0 : i32, i32
  }
  func.func @transform_7(%arg0: i32) -> (i32, i32) {
    %c0_i32 = arith.constant 0 : i32
    %c0_i32_0 = arith.constant 0 : i32
    return %arg0, %c0_i32 : i32, i32
  }
}

</mosaic_0001>

<llo_original>
// kernel: tpu_custom_call.1
$region0: #{tpu_custom_call.1}
  #allocation0 [shape = 'u32[]', space=smem, size = 0x4, offset = 0x4, fixed_abs, tag = 'smem constant byte address 0x4 - core index']
  #allocation1 [shape = 'u32[72,128]{1,0:T(1,128)}', space=vmem, size = 0x9000, scoped, tag = 'internal scratch']
  %s0 = inlined_call_operand.hbm [shape: f32[2,32], index: 0, kind: input, shape index: {}]
  %s1 = inlined_call_operand.hbm [shape: f32[32,64], index: 1, kind: input, shape index: {}]
  %s2 = inlined_call_operand.vmem [shape: f32[1,64], index: 2, kind: input, shape index: {}]
  %s3 = inlined_call_operand.hbm [shape: f32[64,64], index: 3, kind: input, shape index: {}]
  %s4 = inlined_call_operand.vmem [shape: f32[1,64], index: 4, kind: input, shape index: {}]
  %s5 = inlined_call_operand.hbm [shape: f32[64,128], index: 5, kind: input, shape index: {}]
  %s6 = inlined_call_operand.vmem [shape: f32[1,128], index: 6, kind: input, shape index: {}]
  %s7 = inlined_call_operand.hbm [shape: f32[2,128], index: 7, kind: output, shape index: {}]
  %s8 = sld [smem:[#allocation0]]
  $region54: #{tpu_custom_call.1} parent=0
    _
  %s10 = ssub.s32 1, %s8
  %s11 = scalar_select 0, %s10, %s8
  $region1: #{tpu_custom_call.1} parent=0
    #allocation2 [shape = 'u8[1024]{0}', space=vmem, size = 0x400, scoped, tag = 'input window, operand 0, single buffered']
    #allocation3 [shape = 's32[1]{0}', space=sflag, size = 0x4, scoped, tag = 'scoped memory for tpu_custom_call.1']
    #allocation4 [shape = 's32[1]{0}', space=sflag, size = 0x4, scoped, tag = 'scoped memory for tpu_custom_call.1']
    #allocation5 [shape = 'u8[16384]{0}', space=vmem, size = 0x4000, scoped, tag = 'input window, operand 1, single buffered']
    #allocation6 [shape = 's32[1]{0}', space=sflag, size = 0x4, scoped, tag = 'scoped memory for tpu_custom_call.1']
    #allocation7 [shape = 'u8[32768]{0}', space=vmem, size = 0x8000, scoped, tag = 'input window, operand 3, single buffered']
    #allocation8 [shape = 'u8[32768]{0}', space=vmem, size = 0x8000, scoped, tag = 'input window, operand 5, single buffered']
    #allocation9 [shape = 's32[1]{0}', space=sflag, size = 0x4, scoped, tag = 'scoped memory for tpu_custom_call.1']
    #allocation10 [shape = 'u8[1024]{0}', space=vmem, size = 0x400, scoped, tag = 'output window, operand 0, single buffered']
    %12 = vsyncpa [#allocation3], 0
    %13 = vsyncpa [#allocation6], 0
    %14 = vsyncpa [#allocation9], 0
    %15 = vsyncpa [#allocation4], 0
    // Predicated region
    $region2: #{tpu_custom_call.1} parent=1 // pred_check
      _
    $region3: #{tpu_custom_call.1} parent=1 // pred_check_branch
      %17 = sbr.rel (0) target = $region5
    $region4: #{tpu_custom_call.1} parent=1 // pred_region
      %19 = vsyncadd [#allocation3], 0
      %s21 = sshll.u32 %s0, 4
      %s22 = int_to_ptr.hbm [resolvable:$true] %s21
      %s23 = sshll.u32 [#allocation2], 4
      %s24 = int_to_ptr.vmem [resolvable:$true] %s23
      %26 = dma.hbm_to_vmem [thread:$0]  %s22, 32, %s24, [#allocation3]
    $region5: #{tpu_custom_call.1} parent=1 // pred_fallthru
      _
    // Predicated region
    $region6: #{tpu_custom_call.1} parent=1 // pred_check
      _
    $region7: #{tpu_custom_call.1} parent=1 // pred_check_branch
      %28 = sbr.rel (0) target = $region9
    $region8: #{tpu_custom_call.1} parent=1 // pred_region
      %30 = vsyncadd [#allocation6], 0
      %s31 = sshll.u32 %s1, 4
      %s32 = int_to_ptr.hbm [resolvable:$true] %s31
      %s33 = sshll.u32 [#allocation5], 4
      %s34 = int_to_ptr.vmem [resolvable:$true] %s33
      %39 = dma.hbm_to_vmem [thread:$0]  %s32, 512, %s34, [#allocation6], 128, 128, 8
    $region9: #{tpu_custom_call.1} parent=1 // pred_fallthru
      _
    // Predicated region
    $region10: #{tpu_custom_call.1} parent=1 // pred_check
      _
    $region11: #{tpu_custom_call.1} parent=1 // pred_check_branch
      %41 = sbr.rel (0) target = $region13
    $region12: #{tpu_custom_call.1} parent=1 // pred_region
      _
    $region13: #{tpu_custom_call.1} parent=1 // pred_fallthru
      _
    // Predicated region
    $region14: #{tpu_custom_call.1} parent=1 // pred_check
      _
    $region15: #{tpu_custom_call.1} parent=1 // pred_check_branch
      %43 = sbr.rel (0) target = $region17
    $region16: #{tpu_custom_call.1} parent=1 // pred_region
      %45 = vsyncadd [#allocation6], 0
      %s46 = sshll.u32 %s3, 4
      %s47 = int_to_ptr.hbm [resolvable:$true] %s46
      %s48 = sshll.u32 [#allocation7], 4
      %s49 = int_to_ptr.vmem [resolvable:$true] %s48
      %54 = dma.hbm_to_vmem [thread:$0]  %s47, 1024, %s49, [#allocation6], 128, 128, 8
    $region17: #{tpu_custom_call.1} parent=1 // pred_fallthru
      _
    // Predicated region
    $region18: #{tpu_custom_call.1} parent=1 // pred_check
      _
    $region19: #{tpu_custom_call.1} parent=1 // pred_check_branch
      %56 = sbr.rel (0) target = $region21
    $region20: #{tpu_custom_call.1} parent=1 // pred_region
      _
    $region21: #{tpu_custom_call.1} parent=1 // pred_fallthru
      _
    // Predicated region
    $region22: #{tpu_custom_call.1} parent=1 // pred_check
      _
    $region23: #{tpu_custom_call.1} parent=1 // pred_check_branch
      %58 = sbr.rel (0) target = $region25
    $region24: #{tpu_custom_call.1} parent=1 // pred_region
      %60 = vsyncadd [#allocation9], 0
      %s61 = sshll.u32 %s5, 4
      %s62 = int_to_ptr.hbm [resolvable:$true] %s61
      %s63 = sshll.u32 [#allocation8], 4
      %s64 = int_to_ptr.vmem [resolvable:$true] %s63
      %69 = dma.hbm_to_vmem [thread:$0]  %s62, 1024, %s64, [#allocation9], 128, 128, 8
    $region25: #{tpu_custom_call.1} parent=1 // pred_fallthru
      _
    // Predicated region
    $region26: #{tpu_custom_call.1} parent=1 // pred_check
      _
    $region27: #{tpu_custom_call.1} parent=1 // pred_check_branch
      %71 = sbr.rel (0) target = $region29
    $region28: #{tpu_custom_call.1} parent=1 // pred_region
      _
    $region29: #{tpu_custom_call.1} parent=1 // pred_fallthru
      _
    // Predicated region
    $region30: #{tpu_custom_call.1} parent=1 // pred_check
      _
    $region31: #{tpu_custom_call.1} parent=1 // pred_check_branch
      %73 = sbr.rel (0) target = $region33
    $region32: #{tpu_custom_call.1} parent=1 // pred_region
      %75 = dma.done [#allocation3], 32
    $region33: #{tpu_custom_call.1} parent=1 // pred_fallthru
      _
    // Predicated region
    $region34: #{tpu_custom_call.1} parent=1 // pred_check
      _
    $region35: #{tpu_custom_call.1} parent=1 // pred_check_branch
      %77 = sbr.rel (0) target = $region37
    $region36: #{tpu_custom_call.1} parent=1 // pred_region
      %79 = dma.done [#allocation6], 512
    $region37: #{tpu_custom_call.1} parent=1 // pred_fallthru
      _
    // Predicated region
    $region38: #{tpu_custom_call.1} parent=1 // pred_check
      _
    $region39: #{tpu_custom_call.1} parent=1 // pred_check_branch
      %81 = sbr.rel (0) target = $region41
    $region40: #{tpu_custom_call.1} parent=1 // pred_region
      %83 = dma.done [#allocation6], 1024
    $region41: #{tpu_custom_call.1} parent=1 // pred_fallthru
      _
    // Predicated region
    $region42: #{tpu_custom_call.1} parent=1 // pred_check
      _
    $region43: #{tpu_custom_call.1} parent=1 // pred_check_branch
      %85 = sbr.rel (0) target = $region45
    $region44: #{tpu_custom_call.1} parent=1 // pred_region
      %87 = dma.done [#allocation9], 1024
    $region45: #{tpu_custom_call.1} parent=1 // pred_fallthru
      _
    %v88 = vld [vmem:[#allocation2] sm:$0x3]
    %v89 = vld [vmem:[#allocation5] sm:$0xff]
    %v90 = vld [vmem:[#allocation5 + $0x8] sm:$0xff]
    %v91 = vld [vmem:[#allocation5 + $0x10] sm:$0xff]
    %v92 = vld [vmem:[#allocation5 + $0x18] sm:$0xff]
    %v93 = vld [vmem:[%s2] sm:$0x1]
    %v95 = vperm.slane %v93, 0
    %vm97 = vcmask 261120
    %v99 = vsel %vm97, %v88, 0
    %101 = vmatpush.msra.mxu0 0.0
    %102 = vmatpush.msra.mxu0 0.0
    %103 = vmatpush.msra.mxu0 0.0
    %104 = vmatpush.msra.mxu0 0.0
    %105 = vmatpush.msra.mxu0 0.0
    %106 = vmatpush.msra.mxu0 0.0
    %107 = vmatpush.msra.mxu0 0.0
    %108 = vmatpush.msra.mxu0 0.0
    %109 = vmatpush.msra.mxu0 0.0
    %110 = vmatpush.msra.mxu0 0.0
    %111 = vmatpush.msra.mxu0 0.0
    %112 = vmatpush.msra.mxu0 0.0
    %113 = vmatpush.msra.mxu0 %v92
    %114 = vmatpush.msra.mxu0 %v91
    %115 = vmatpush.msra.mxu0 %v90
    %116 = vmatpush.msra.mxu0 %v89
    %117 = vmatmul.f32.gmra.mxu0 %v99
    %v118 = vpop.f32.mrf.mxu0
    %v119 = vadd.f32 %v95, %v118
    %120 = vdwg.mxu0
    %v121 = vtanh.pop %v119
    %v122 = vld [vmem:[#allocation7] sm:$0xff]
    %v123 = vld [vmem:[#allocation7 + $0x8] sm:$0xff]
    %v124 = vld [vmem:[#allocation7 + $0x10] sm:$0xff]
    %v125 = vld [vmem:[#allocation7 + $0x18] sm:$0xff]
    %v126 = vld [vmem:[#allocation7 + $0x20] sm:$0xff]
    %v127 = vld [vmem:[#allocation7 + $0x28] sm:$0xff]
    %v128 = vld [vmem:[#allocation7 + $0x30] sm:$0xff]
    %v129 = vld [vmem:[#allocation7 + $0x38] sm:$0xff]
    %v130 = vld [vmem:[%s4] sm:$0x1]
    %v132 = vperm.slane %v130, 0
    %vm134 = vcmask 523264
    %v136 = vsel %vm134, %v121, 0
    %138 = vmatpush.msra.mxu0 0.0
    %139 = vmatpush.msra.mxu0 0.0
    %140 = vmatpush.msra.mxu0 0.0
    %141 = vmatpush.msra.mxu0 0.0
    %142 = vmatpush.msra.mxu0 0.0
    %143 = vmatpush.msra.mxu0 0.0
    %144 = vmatpush.msra.mxu0 0.0
    %145 = vmatpush.msra.mxu0 0.0
    %146 = vmatpush.msra.mxu0 %v129
    %147 = vmatpush.msra.mxu0 %v128
    %148 = vmatpush.msra.mxu0 %v127
    %149 = vmatpush.msra.mxu0 %v126
    %150 = vmatpush.msra.mxu0 %v125
    %151 = vmatpush.msra.mxu0 %v124
    %152 = vmatpush.msra.mxu0 %v123
    %153 = vmatpush.msra.mxu0 %v122
    %154 = vmatmul.f32.gmra.mxu0 %v136
    %v155 = vpop.f32.mrf.mxu0
    %v156 = vadd.f32 %v132, %v155
    %157 = vdwg.mxu0
    %v158 = vtanh.pop %v156
    %v159 = vld [vmem:[#allocation8] sm:$0xff]
    %v160 = vld [vmem:[#allocation8 + $0x8] sm:$0xff]
    %v161 = vld [vmem:[#allocation8 + $0x10] sm:$0xff]
    %v162 = vld [vmem:[#allocation8 + $0x18] sm:$0xff]
    %v163 = vld [vmem:[#allocation8 + $0x20] sm:$0xff]
    %v164 = vld [vmem:[#allocation8 + $0x28] sm:$0xff]
    %v165 = vld [vmem:[#allocation8 + $0x30] sm:$0xff]
    %v166 = vld [vmem:[#allocation8 + $0x38] sm:$0xff]
    %v167 = vld [vmem:[%s6] sm:$0x1]
    %v169 = vperm.slane %v167, 0
    %v172 = vsel %vm134, %v158, 0
    %174 = vmatpush.msra.mxu0 0.0
    %175 = vmatpush.msra.mxu0 0.0
    %176 = vmatpush.msra.mxu0 0.0
    %177 = vmatpush.msra.mxu0 0.0
    %178 = vmatpush.msra.mxu0 0.0
    %179 = vmatpush.msra.mxu0 0.0
    %180 = vmatpush.msra.mxu0 0.0
    %181 = vmatpush.msra.mxu0 0.0
    %182 = vmatpush.msra.mxu0 %v166
    %183 = vmatpush.msra.mxu0 %v165
    %184 = vmatpush.msra.mxu0 %v164
    %185 = vmatpush.msra.mxu0 %v163
    %186 = vmatpush.msra.mxu0 %v162
    %187 = vmatpush.msra.mxu0 %v161
    %188 = vmatpush.msra.mxu0 %v160
    %189 = vmatpush.msra.mxu0 %v159
    %190 = vmatmul.f32.gmra.mxu0 %v172
    %v191 = vpop.f32.mrf.mxu0
    %v192 = vadd.f32 %v169, %v191
    %193 = vdwg.mxu0
    %194 = vst [vmem:[#allocation10] sm:$0x3] %v192
    // Predicated region
    $region46: #{tpu_custom_call.1} parent=1 // pred_check
      _
    $region47: #{tpu_custom_call.1} parent=1 // pred_check_branch
      %196 = sbr.rel (0) target = $region49
    $region48: #{tpu_custom_call.1} parent=1 // pred_region
      %198 = vsyncadd [#allocation4], 0
      %s200 = sshll.u32 [#allocation10], 4
      %s201 = int_to_ptr.vmem [resolvable:$true] %s200
      %s202 = sshll.u32 %s7, 4
      %s203 = int_to_ptr.hbm [resolvable:$true] %s202
      %205 = dma.vmem_to_hbm [thread:$0]  %s201, 32, %s203, [#allocation4]
    $region49: #{tpu_custom_call.1} parent=1 // pred_fallthru
      _
    // Predicated region
    $region50: #{tpu_custom_call.1} parent=1 // pred_check
      _
    $region51: #{tpu_custom_call.1} parent=1 // pred_check_branch
      %207 = sbr.rel (0) target = $region53
    $region52: #{tpu_custom_call.1} parent=1 // pred_region
      %209 = dma.done [#allocation4], 32
    $region53: #{tpu_custom_call.1} parent=1 // pred_fallthru
      _
    %210 = vsyncpa [#allocation3], 1
    %211 = vsyncpa [#allocation6], 1
    %212 = vsyncpa [#allocation9], 1
    %213 = vsyncpa [#allocation4], 1

</llo_original>
